<compile_context>
chip_gen: v5e
topology: v5e:2x2
jax: 0.10.0
libtpu: 0.0.40
codegen_flags: <defaults>
</compile_context>

<pallas_src>
import functools

import jax
import jax.numpy as jnp
from jax.experimental import pallas as pl
from jax.experimental.pallas import tpu as pltpu

_LANES = 128                 # batch elements per packed row (lane dim of output)
_FEATURES = 4                # input features
_ROW = _LANES * _FEATURES    # 512: lane width of the packed input rows


def _round_up(v, m):
    return ((v + m - 1) // m) * m


def _fused_dense_kernel(w_hi_ref, w_lo_ref, x_ref, o_ref, *, split_x):
    """One grid step.

    w_hi_ref / w_lo_ref : VMEM (512, 128) bf16 structured weights
                          (hi / lo bf16 halves of the fused f32 weights),
                          W[4*b + f, b] = w_eff[f].
    x_ref               : VMEM (block_rows, 512) f32 or bf16; lane j of row r
                          holds x[128*r + j // 4, j % 4]  (row-major view).
    o_ref               : VMEM (block_rows, 128); lane b of row r is y[128*r + b].
    """
    w_hi = w_hi_ref[...]
    w_lo = w_lo_ref[...]
    if split_x:
        # Exact-ish f32 path: error-free hi/lo bf16 split of the activations.
        xf = x_ref[...]                                              # f32
        x_hi = xf.astype(jnp.bfloat16)                               # top ~8 mantissa bits
        x_lo = (xf - x_hi.astype(jnp.float32)).astype(jnp.bfloat16)  # next ~8 bits
    else:
        x_hi = x_ref[...]                                            # already bf16
        x_lo = None

    # Native bf16 MXU passes, f32 accumulation (preferred_element_type).
    acc = jnp.dot(x_hi, w_hi, preferred_element_type=jnp.float32)
    acc = acc + jnp.dot(x_hi, w_lo, preferred_element_type=jnp.float32)
    if split_x:
        acc = acc + jnp.dot(x_lo, w_hi, preferred_element_type=jnp.float32)

    o_ref[...] = acc.astype(o_ref.dtype)                             # dense (br, 128) store


@functools.partial(jax.jit, static_argnames=("block_rows", "min_batch_for_kernel"))
def list_dense_forward(x, weights, *, block_rows=1024, min_batch_for_kernel=4096):
    """x: (N, 4) f32/bf16; weights: [(4,4),(4,4),(4,4),(4,1)].  Returns (N, 1)."""
    n, feat = x.shape
    assert feat == _FEATURES
    if x.dtype not in (jnp.float32, jnp.bfloat16):
        x = x.astype(jnp.float32)

    # Fold the weight chain (gradients w.r.t. each W_i still flow through it).
    w_eff = weights[0].astype(jnp.float32)
    for w in weights[1:]:
        w_eff = jnp.dot(w_eff, w.astype(jnp.float32),
                        precision=jax.lax.Precision.HIGHEST)          # (4, 1)
    w_vec = w_eff.reshape(_FEATURES)

    # Small-N fallback: launch / pad / slice overhead would dominate tiny batches.
    if n < min_batch_for_kernel:
        return jnp.dot(x.astype(jnp.float32), w_eff,
                       precision=jax.lax.Precision.HIGHEST).astype(x.dtype)

    # hi/lo bf16 split of the fused weights (keeps ~f32 weight accuracy on the MXU).
    w_hi_vec = w_vec.astype(jnp.bfloat16)
    w_lo_vec = (w_vec - w_hi_vec.astype(jnp.float32)).astype(jnp.bfloat16)

    # Structured de-interleave matrices: W[4*b + f, b] = w[f], zeros elsewhere.
    eye = jnp.eye(_LANES, dtype=jnp.float32)                          # (128, 128)

    def _structured(wv):
        m = eye[:, None, :] * wv.astype(jnp.float32)[None, :, None]   # (128, 4, 128)
        return m.reshape(_ROW, _LANES).astype(jnp.bfloat16)           # (512, 128)

    w_hi_mat = _structured(w_hi_vec)
    w_lo_mat = _structured(w_lo_vec)

    # Pad only up to a multiple of 128 batch elements (no transpose; no pad at
    # all when N is already 128-aligned), then take the pure row-major reshape.
    # A producer that already emits the flat feature-interleaved buffer avoids
    # even this reshape.
    n_pad = max(_round_up(n, _LANES), 8 * _LANES)
    if n_pad != n:
        x = jnp.pad(x, ((0, n_pad - n), (0, 0)))
    rows = n_pad // _LANES
    x2 = x.reshape(rows, _ROW)                                        # (rows, 512)

    # Block rows: multiple of 8, never larger than the problem; ragged tails
    # are handled by Pallas' masked partial blocks (pl.cdiv grid).
    br = min(_round_up(block_rows, 8), max(8, (rows // 8) * 8))
    grid = pl.cdiv(rows, br)

    split_x = x.dtype == jnp.float32
    n_dots = 3 if split_x else 2
    kernel = functools.partial(_fused_dense_kernel, split_x=split_x)

    out2 = pl.pallas_call(
        kernel,
        out_shape=jax.ShapeDtypeStruct((rows, _LANES), x.dtype),
        grid=(grid,),
        in_specs=[
            pl.BlockSpec((_ROW, _LANES), lambda i: (0, 0)),   # w_hi: fetched once, resident
            pl.BlockSpec((_ROW, _LANES), lambda i: (0, 0)),   # w_lo: fetched once, resident
            pl.BlockSpec((br, _ROW), lambda i: (i, 0)),       # x tiles: dense (br, 512)
        ],
        out_specs=pl.BlockSpec((br, _LANES), lambda i: (i, 0)),
        compiler_params=pltpu.CompilerParams(
            dimension_semantics=("parallel",),                # megacore sharding on v7x
            vmem_limit_bytes=32 * 1024 * 1024,
        ),
        cost_estimate=pl.CostEstimate(
            flops=2 * _ROW * _LANES * br * grid * n_dots,
            transcendentals=0,
            bytes_accessed=(x2.size * x2.dtype.itemsize
                            + rows * _LANES * x.dtype.itemsize
                            + 2 * _ROW * _LANES * 2),
        ),
    )(w_hi_mat, w_lo_mat, x2)

    # Cheap final view back to the module's (N, 1) contract.
    return out2.reshape(n_pad, 1)[:n]


def init_params(key):
    """Deterministic stand-in for the nn.ParameterList of torch.randn tensors."""
    k0, k1, k2, k3 = jax.random.split(key, 4)
    return [
        jax.random.normal(k0, (4, 4), dtype=jnp.float32),
        jax.random.normal(k1, (4, 4), dtype=jnp.float32),
        jax.random.normal(k2, (4, 4), dtype=jnp.float32),
        jax.random.normal(k3, (4, 1), dtype=jnp.float32),
    ]


def _reference(x, params):
    """Sequential matmuls like the torch module, at full f32 precision."""
    y = x.astype(jnp.float32)
    for w in params:
        y = jnp.dot(y, w, precision=jax.lax.Precision.HIGHEST)
    return y


if __name__ == "__main__":
    key = jax.random.PRNGKey(0)
    kp, kx = jax.random.split(key)
    params = init_params(kp)

    # 1) Multi-step grid with a small block (exercises pipelining + parallel grid).
    x = jax.random.normal(kx, (8192, 4), dtype=jnp.float32)
    out = jax.block_until_ready(list_dense_forward(x, params, block_rows=16))
    assert out.shape == (8192, 1)
    assert jnp.allclose(out, _reference(x, params), atol=5e-2, rtol=5e-3)

    # 2) Ragged batch (6000 -> padded to 6016) + masked partial last grid block.
    x_r = jax.random.normal(jax.random.fold_in(kx, 1), (6000, 4), dtype=jnp.float32)
    out_r = jax.block_until_ready(list_dense_forward(x_r, params, block_rows=16))
    assert out_r.shape == (6000, 1)
    assert jnp.allclose(out_r, _reference(x_r, params), atol=5e-2, rtol=5e-3)

    # 3) Default production tiling: block_rows=1024 -> 2 grid steps, ~2.5 MiB each.
    x_big = jax.random.normal(jax.random.fold_in(kx, 2), (262144, 4), dtype=jnp.float32)
    out_big = jax.block_until_ready(list_dense_forward(x_big, params))
    assert out_big.shape == (262144, 1)
    assert jnp.allclose(out_big, _reference(x_big, params), atol=5e-2, rtol=5e-3)

    # 4) bf16 HBM-transfer path (half the read traffic; f32 accumulation in-kernel).
    x_bf = x.astype(jnp.bfloat16)
    out_bf = jax.block_until_ready(list_dense_forward(x_bf, params, block_rows=16))
    assert out_bf.shape == (8192, 1)
    assert jnp.allclose(out_bf.astype(jnp.float32), _reference(x_bf, params),
                        atol=2e-1, rtol=2e-2)

    # 5) Small-N fallback: the module's own example x = ones(1, 4).
    x_tiny = jnp.ones((1, 4), dtype=jnp.float32)
    out_tiny = jax.block_until_ready(list_dense_forward(x_tiny, params))
    assert out_tiny.shape == (1, 1)
    assert jnp.allclose(out_tiny, _reference(x_tiny, params), atol=5e-2, rtol=5e-3)

    print("KERNEL_OK")
</pallas_src>

<mosaic_0001>
module attributes {stable_mosaic.version = 11 : i64} {
  func.func @_fused_dense_kernel(%arg0: i32, %arg1: memref<512x128xbf16, #tpu.memory_space<vmem>>, %arg2: memref<512x128xbf16, #tpu.memory_space<vmem>>, %arg3: memref<16x512xf32, #tpu.memory_space<vmem>>, %arg4: memref<16x128xf32, #tpu.memory_space<vmem>>) attributes {dimension_semantics = [#tpu.dimension_semantics<parallel>], iteration_bounds = array<i64: 4>, scalar_prefetch = 0 : i64, scratch_operands = 0 : i64, tpu.core_type = #tpu.core_type<tc>, window_params = [{pipeline_mode = #tpu.pipeline_mode<synchronous>, transform_indices = @transform_0, window_bounds = array<i64: 512, 128>}, {pipeline_mode = #tpu.pipeline_mode<synchronous>, transform_indices = @transform_1, window_bounds = array<i64: 512, 128>}, {transform_indices = @transform_2, window_bounds = array<i64: 16, 512>}, {transform_indices = @transform_3, window_bounds = array<i64: 16, 128>}]} {
    %c0 = arith.constant 0 : index
    %c0_0 = arith.constant 0 : index
    %0 = vector.load %arg1[%c0, %c0_0] : memref<512x128xbf16, #tpu.memory_space<vmem>>, vector<512x128xbf16>
    %c0_1 = arith.constant 0 : index
    %c0_2 = arith.constant 0 : index
    %1 = vector.load %arg2[%c0_1, %c0_2] : memref<512x128xbf16, #tpu.memory_space<vmem>>, vector<512x128xbf16>
    %c0_3 = arith.constant 0 : index
    %c0_4 = arith.constant 0 : index
    %2 = vector.load %arg3[%c0_3, %c0_4] : memref<16x512xf32, #tpu.memory_space<vmem>>, vector<16x512xf32>
    %3 = arith.truncf %2 : vector<16x512xf32> to vector<16x512xbf16>
    %4 = arith.extf %3 : vector<16x512xbf16> to vector<16x512xf32>
    %5 = arith.subf %2, %4 : vector<16x512xf32>
    %6 = arith.truncf %5 : vector<16x512xf32> to vector<16x512xbf16>
    %cst = arith.constant dense<0.000000e+00> : vector<16x128xf32>
    %7 = tpu.matmul %3, %0, %cst {dimension_numbers = #tpu.dot_dimension_numbers<[1], [0], [0], [1], [0, 0, 1, 1], [], []>} : vector<16x512xbf16>, vector<512x128xbf16>, vector<16x128xf32> -> vector<16x128xf32>
    %cst_5 = arith.constant dense<0.000000e+00> : vector<16x128xf32>
    %8 = tpu.matmul %3, %1, %cst_5 {dimension_numbers = #tpu.dot_dimension_numbers<[1], [0], [0], [1], [0, 0, 1, 1], [], []>} : vector<16x512xbf16>, vector<512x128xbf16>, vector<16x128xf32> -> vector<16x128xf32>
    %9 = arith.addf %7, %8 : vector<16x128xf32>
    %cst_6 = arith.constant dense<0.000000e+00> : vector<16x128xf32>
    %10 = tpu.matmul %6, %0, %cst_6 {dimension_numbers = #tpu.dot_dimension_numbers<[1], [0], [0], [1], [0, 0, 1, 1], [], []>} : vector<16x512xbf16>, vector<512x128xbf16>, vector<16x128xf32> -> vector<16x128xf32>
    %11 = arith.addf %9, %10 : vector<16x128xf32>
    %c0_7 = arith.constant 0 : index
    %c0_8 = arith.constant 0 : index
    %12 = vector.load %arg4[%c0_7, %c0_8] : memref<16x128xf32, #tpu.memory_space<vmem>>, vector<16x128xf32>
    tpu.vector_store %arg4[%c0_7, %c0_8], %11 {strides = array<i32>} : memref<16x128xf32, #tpu.memory_space<vmem>>, vector<16x128xf32>,
    return
  }
  func.func @transform_0(%arg0: i32) -> (i32, i32) {
    %c0_i32 = arith.constant 0 : i32
    %c0_i32_0 = arith.constant 0 : i32
    %c0_i32_1 = arith.constant 0 : i32
    return %c0_i32, %c0_i32_0 : i32, i32
  }
  func.func @transform_1(%arg0: i32) -> (i32, i32) {
    %c0_i32 = arith.constant 0 : i32
    %c0_i32_0 = arith.constant 0 : i32
    %c0_i32_1 = arith.constant 0 : i32
    return %c0_i32, %c0_i32_0 : i32, i32
  }
  func.func @transform_2(%arg0: i32) -> (i32, i32) {
    %c0_i32 = arith.constant 0 : i32
    %c0_i32_0 = arith.constant 0 : i32
    return %arg0, %c0_i32 : i32, i32
  }
  func.func @transform_3(%arg0: i32) -> (i32, i32) {
    %c0_i32 = arith.constant 0 : i32
    %c0_i32_0 = arith.constant 0 : i32
    return %arg0, %c0_i32 : i32, i32
  }
}

</mosaic_0001>

<llo_original>
// kernel: list_dense_forward.1
$region0: #{list_dense_forward.1}
  #allocation0 [shape = 'u32[]', space=smem, size = 0x4, offset = 0x4, fixed_abs, tag = 'smem constant byte address 0x4 - core index']
  #allocation1 [shape = 'u32[72,128]{1,0:T(1,128)}', space=vmem, size = 0x9000, scoped, tag = 'internal scratch']
  %s0 = inlined_call_operand.vmem [shape: bf16[512,128], index: 0, kind: input, shape index: {}]
  %s1 = inlined_call_operand.vmem [shape: bf16[512,128], index: 1, kind: input, shape index: {}]
  %s2 = inlined_call_operand.vmem [shape: f32[64,512], index: 2, kind: input, shape index: {}]
  %s3 = inlined_call_operand.hbm [shape: f32[64,128], index: 3, kind: output, shape index: {}]
  %s4 = sld [smem:[#allocation0]]
  $region45: #{list_dense_forward.1} parent=0
    _
  %s6 = ssub.s32 1, %s4
  %s7 = scalar_select 0, %s6, %s4
  $region1: #{list_dense_forward.1} parent=0
    #allocation2 [shape = 'u8[16384]{0}', space=vmem, size = 0x4000, scoped, tag = 'output window, operand 0']
    #allocation3 [shape = 's32[2]{0}', space=sflag, size = 0x8, scoped, tag = 'scoped memory for list_dense_forward.1']
    %8 = vsyncpa [#allocation3], 0
    %s9 = scalar_lea.sflag [#allocation3], 1
    %10 = vsyncpa %s9, 0
    loop: start=0, step=1, limit=6
    $region2: #{list_dense_forward.1} parent=1 // loop_pre_header
      _
    $region3: #{list_dense_forward.1} parent=1 // loop_header
      %s12 = sphi 0, %s16
      %p13 = scmp.ge.s32.totalorder %s12, 6
      %s20 = sphi 0, %s20
      %s22 = sphi 0, %s20
      %s23 = sphi 0, %s22
      %s37 = sphi 0, %s23
      %s41 = sphi 0, %s41
      %s43 = sphi 0, %s41
      %s44 = sphi 0, %s43
      %s58 = sphi 0, %s44
      %s64 = sphi 0, %s66
      %s67 = sphi 0, %s64
      %s68 = sphi 0, %s67
      %s84 = sphi 0, %s68
      %s90 = sphi 0, %s92
      %s93 = sphi 0, %s90
      %s94 = sphi 0, %s93
      %s110 = sphi 0, %s94
    $region4: #{list_dense_forward.1} parent=1 // loop_header_branch
      %15 = sbr.rel (%p13) target = $region8
    $region5: #{list_dense_forward.1} parent=1 // loop_body
      %s17 = ssub.s32 %s12, 1
      %s18 = ssub.s32 %s12, 2
      %s19 = sadd.s32 %s12, 1
      %s21 = sadd.s32 %s20, 1
      %p24 = scmp.eq.s32.totalorder %s12, 3
      %p25 = scmp.ne.s32.totalorder %s20, %s22
      %p26 = scmp.eq.s32.totalorder %s12, 0
      %p27 = por %p25, %p26
      %p28 = scmp.ne.s32.totalorder %s20, %s22
      %p29 = scmp.eq.s32.totalorder %s17, 3
      %p30 = por %p28, %p29
      %p31 = scmp.ne.s32.totalorder %s22, %s23
      %p32 = scmp.eq.s32.totalorder %s17, 0
      %p33 = por %p31, %p32
      %p34 = scmp.ne.s32.totalorder %s22, %s23
      %p35 = scmp.eq.s32.totalorder %s18, 3
      %p36 = por %p34, %p35
      %p38 = scmp.ne.s32.totalorder %s23, %s37
      %p39 = scmp.eq.s32.totalorder %s18, 0
      %p40 = por %p38, %p39
      %s42 = sadd.s32 %s41, 1
      %p45 = scmp.eq.s32.totalorder %s12, 3
      %p46 = scmp.ne.s32.totalorder %s41, %s43
      %p47 = scmp.eq.s32.totalorder %s12, 0
      %p48 = por %p46, %p47
      %p49 = scmp.ne.s32.totalorder %s41, %s43
      %p50 = scmp.eq.s32.totalorder %s17, 3
      %p51 = por %p49, %p50
      %p52 = scmp.ne.s32.totalorder %s43, %s44
      %p53 = scmp.eq.s32.totalorder %s17, 0
      %p54 = por %p52, %p53
      %p55 = scmp.ne.s32.totalorder %s43, %s44
      %p56 = scmp.eq.s32.totalorder %s18, 3
      %p57 = por %p55, %p56
      %p59 = scmp.ne.s32.totalorder %s44, %s58
      %p60 = scmp.eq.s32.totalorder %s18, 0
      %p61 = por %p59, %p60
      %s62 = ssub.s32 %s12, %s19
      %p63 = scmp.eq.s32.totalorder %s62, 0
      %s65 = sadd.s32 %s64, 1
      %s66 = scalar_select %p63, %s64, %s65
      %p69 = pneg %p63
      %p70 = scmp.eq.s32.totalorder %s12, 3
      %p71 = por %p69, %p70
      %p72 = scmp.ne.s32.totalorder %s64, %s67
      %p73 = scmp.eq.s32.totalorder %s12, 0
      %p74 = por %p72, %p73
      %p75 = scmp.ne.s32.totalorder %s64, %s67
      %p76 = scmp.eq.s32.totalorder %s17, 3
      %p77 = por %p75, %p76
      %p78 = scmp.ne.s32.totalorder %s67, %s68
      %p79 = scmp.eq.s32.totalorder %s17, 0
      %p80 = por %p78, %p79
      %p81 = scmp.ne.s32.totalorder %s67, %s68
      %p82 = scmp.eq.s32.totalorder %s18, 3
      %p83 = por %p81, %p82
      %p85 = scmp.ne.s32.totalorder %s68, %s84
      %p86 = scmp.eq.s32.totalorder %s18, 0
      %p87 = por %p85, %p86
      %s88 = ssub.s32 %s12, %s19
      %p89 = scmp.eq.s32.totalorder %s88, 0
      %s91 = sadd.s32 %s90, 1
      %s92 = scalar_select %p89, %s90, %s91
      %p95 = pneg %p89
      %p96 = scmp.eq.s32.totalorder %s12, 3
      %p97 = por %p95, %p96
      %p98 = scmp.ne.s32.totalorder %s90, %s93
      %p99 = scmp.eq.s32.totalorder %s12, 0
      %p100 = por %p98, %p99
      %p101 = scmp.ne.s32.totalorder %s90, %s93
      %p102 = scmp.eq.s32.totalorder %s17, 3
      %p103 = por %p101, %p102
      %p104 = scmp.ne.s32.totalorder %s93, %s94
      %p105 = scmp.eq.s32.totalorder %s17, 0
      %p106 = por %p104, %p105
      %p107 = scmp.ne.s32.totalorder %s93, %s94
      %p108 = scmp.eq.s32.totalorder %s18, 3
      %p109 = por %p107, %p108
      %p111 = scmp.ne.s32.totalorder %s94, %s110
      %p112 = scmp.eq.s32.totalorder %s18, 0
      %p113 = por %p111, %p112
      %p114 = scmp.le.s32.totalorder 1, %s12
      %p115 = scmp.lt.s32.totalorder %s12, 5
      %p116 = pnand %p114, %p115
      %p117 = pneg %p116
      // Predicated region
      $region9: #{list_dense_forward.1} parent=5 // pred_check
        _
      $region10: #{list_dense_forward.1} parent=5 // pred_check_branch
        %119 = sbr.rel (%p116) target = $region12
      $region11: #{list_dense_forward.1} parent=5 // pred_region
        %s120 = ssub.s32 %s12, 1
        // Predicated region
        $region13: #{list_dense_forward.1} parent=11 // pred_check
          %p121 = pneg %p33
        $region14: #{list_dense_forward.1} parent=11 // pred_check_branch
          %123 = sbr.rel (%p121) target = $region16
        $region15: #{list_dense_forward.1} parent=11 // pred_region
          _
        $region16: #{list_dense_forward.1} parent=11 // pred_fallthru
          _
        // Predicated region
        $region17: #{list_dense_forward.1} parent=11 // pred_check
          %p124 = pneg %p54
        $region18: #{list_dense_forward.1} parent=11 // pred_check_branch
          %126 = sbr.rel (%p124) target = $region20
        $region19: #{list_dense_forward.1} parent=11 // pred_region
          _
        $region20: #{list_dense_forward.1} parent=11 // pred_fallthru
          _
      $region12: #{list_dense_forward.1} parent=5 // pred_fallthru
        _
      %p127 = scmp.lt.s32.totalorder %s12, 4
      // Predicated region
      $region21: #{list_dense_forward.1} parent=5 // pred_check
        %p128 = pneg %p127
      $region22: #{list_dense_forward.1} parent=5 // pred_check_branch
        %130 = sbr.rel (%p128) target = $region24
      $region23: #{list_dense_forward.1} parent=5 // pred_region
        // Predicated region
        $region25: #{list_dense_forward.1} parent=23 // pred_check
          %p131 = pneg %p74
        $region26: #{list_dense_forward.1} parent=23 // pred_check_branch
          %133 = sbr.rel (%p131) target = $region28
        $region27: #{list_dense_forward.1} parent=23 // pred_region
          %s134 = smul.u32 2, %s12
          %p135 = scmp.lt.s32.totalorder %s134, 7
          %s136 = scalar_select %p135, %s134, 7
          %s137 = smul.addr %s136, 4
          %s138 = smul.addr %s137, 8
          %s139 = scalar_lea.vmem %s2, %s138
          %s140 = smul.u32 2, %s12
        $region28: #{list_dense_forward.1} parent=23 // pred_fallthru
          _
      $region24: #{list_dense_forward.1} parent=5 // pred_fallthru
        _
      %p141 = scmp.le.s32.totalorder 1, %s12
      %p142 = scmp.lt.s32.totalorder %s12, 5
      %p143 = pnand %p141, %p142
      %p144 = pneg %p143
      // Predicated region
      $region29: #{list_dense_forward.1} parent=5 // pred_check
        _
      $region30: #{list_dense_forward.1} parent=5 // pred_check_branch
        %146 = sbr.rel (%p143) target = $region32
      $region31: #{list_dense_forward.1} parent=5 // pred_region
        %s147 = ssub.s32 %s12, 1
        %p148 = pneg %p33
        %p149 = pneg %p30
        %p150 = pneg %p54
        %p151 = pneg %p51
        %s152 = smul.u32 2, %s17
        %p153 = scmp.lt.s32.totalorder %s152, 7
        %s154 = scalar_select %p153, %s152, 7
        %s155 = smul.addr %s154, 4
        %s156 = smul.addr %s155, 8
        %s157 = scalar_lea.vmem %s2, %s156
        %p158 = pneg %p80
        %p159 = pneg %p77
        %p160 = pneg %p106
        %p161 = pneg %p103
        %s162 = sand.u32 %s93, 1
        %s163 = scalar_lea.sflag [#allocation3], %s162
        %s164 = sand.u32 %s93, 1
        %s165 = smul.addr %s164, 16
        %s166 = scalar_lea.vmem [#allocation2], %s165
        %s167 = smul.u32 2, %s17
        %p168 = scmp.lt.s32.totalorder %s167, 7
        %s169 = scalar_select %p168, %s167, 7
        %s170 = smul.addr %s169, 4
        %s171 = smul.addr %s170, 8
        %s172 = scalar_lea.vmem %s2, %s171
        %s173 = smul.u32 2, %s17
        %s174 = smul.u32 2, %s17
        %v175 = vld [vmem:[%s0] sm:$0xf]
        %v176 = vld [vmem:[%s0 + $0x4] sm:$0xf]
        %v177 = vld [vmem:[%s0 + $0x8] sm:$0xf]
        %v178 = vld [vmem:[%s0 + $0xc] sm:$0xf]
        %v179 = vld [vmem:[%s0 + $0x10] sm:$0xf]
        %v180 = vld [vmem:[%s0 + $0x14] sm:$0xf]
        %v181 = vld [vmem:[%s0 + $0x18] sm:$0xf]
        %v182 = vld [vmem:[%s0 + $0x1c] sm:$0xf]
        %v183 = vld [vmem:[%s0 + $0x20] sm:$0xf]
        %v184 = vld [vmem:[%s0 + $0x24] sm:$0xf]
        %v185 = vld [vmem:[%s0 + $0x28] sm:$0xf]
        %v186 = vld [vmem:[%s0 + $0x2c] sm:$0xf]
        %v187 = vld [vmem:[%s0 + $0x30] sm:$0xf]
        %v188 = vld [vmem:[%s0 + $0x34] sm:$0xf]
        %v189 = vld [vmem:[%s0 + $0x38] sm:$0xf]
        %v190 = vld [vmem:[%s0 + $0x3c] sm:$0xf]
        %v191 = vld [vmem:[%s0 + $0x40] sm:$0xf]
        %v192 = vld [vmem:[%s0 + $0x44] sm:$0xf]
        %v193 = vld [vmem:[%s0 + $0x48] sm:$0xf]
        %v194 = vld [vmem:[%s0 + $0x4c] sm:$0xf]
        %v195 = vld [vmem:[%s0 + $0x50] sm:$0xf]
        %v196 = vld [vmem:[%s0 + $0x54] sm:$0xf]
        %v197 = vld [vmem:[%s0 + $0x58] sm:$0xf]
        %v198 = vld [vmem:[%s0 + $0x5c] sm:$0xf]
        %v199 = vld [vmem:[%s0 + $0x60] sm:$0xf]
        %v200 = vld [vmem:[%s0 + $0x64] sm:$0xf]
        %v201 = vld [vmem:[%s0 + $0x68] sm:$0xf]
        %v202 = vld [vmem:[%s0 + $0x6c] sm:$0xf]
        %v203 = vld [vmem:[%s0 + $0x70] sm:$0xf]
        %v204 = vld [vmem:[%s0 + $0x74] sm:$0xf]
        %v205 = vld [vmem:[%s0 + $0x78] sm:$0xf]
        %v206 = vld [vmem:[%s0 + $0x7c] sm:$0xf]
        %v207 = vld [vmem:[%s0 + $0x80] sm:$0xf]
        %v208 = vld [vmem:[%s0 + $0x84] sm:$0xf]
        %v209 = vld [vmem:[%s0 + $0x88] sm:$0xf]
        %v210 = vld [vmem:[%s0 + $0x8c] sm:$0xf]
        %v211 = vld [vmem:[%s0 + $0x90] sm:$0xf]
        %v212 = vld [vmem:[%s0 + $0x94] sm:$0xf]
        %v213 = vld [vmem:[%s0 + $0x98] sm:$0xf]
        %v214 = vld [vmem:[%s0 + $0x9c] sm:$0xf]
        %v215 = vld [vmem:[%s0 + $0xa0] sm:$0xf]
        %v216 = vld [vmem:[%s0 + $0xa4] sm:$0xf]
        %v217 = vld [vmem:[%s0 + $0xa8] sm:$0xf]
        %v218 = vld [vmem:[%s0 + $0xac] sm:$0xf]
        %v219 = vld [vmem:[%s0 + $0xb0] sm:$0xf]
        %v220 = vld [vmem:[%s0 + $0xb4] sm:$0xf]
        %v221 = vld [vmem:[%s0 + $0xb8] sm:$0xf]
        %v222 = vld [vmem:[%s0 + $0xbc] sm:$0xf]
        %v223 = vld [vmem:[%s0 + $0xc0] sm:$0xf]
        %v224 = vld [vmem:[%s0 + $0xc4] sm:$0xf]
        %v225 = vld [vmem:[%s0 + $0xc8] sm:$0xf]
        %v226 = vld [vmem:[%s0 + $0xcc] sm:$0xf]
        %v227 = vld [vmem:[%s0 + $0xd0] sm:$0xf]
        %v228 = vld [vmem:[%s0 + $0xd4] sm:$0xf]
        %v229 = vld [vmem:[%s0 + $0xd8] sm:$0xf]
        %v230 = vld [vmem:[%s0 + $0xdc] sm:$0xf]
        %v231 = vld [vmem:[%s0 + $0xe0] sm:$0xf]
        %v232 = vld [vmem:[%s0 + $0xe4] sm:$0xf]
        %v233 = vld [vmem:[%s0 + $0xe8] sm:$0xf]
        %v234 = vld [vmem:[%s0 + $0xec] sm:$0xf]
        %v235 = vld [vmem:[%s0 + $0xf0] sm:$0xf]
        %v236 = vld [vmem:[%s0 + $0xf4] sm:$0xf]
        %v237 = vld [vmem:[%s0 + $0xf8] sm:$0xf]
        %v238 = vld [vmem:[%s0 + $0xfc] sm:$0xf]
        %v239 = vld [vmem:[%s1] sm:$0xf]
        %v240 = vld [vmem:[%s1 + $0x4] sm:$0xf]
        %v241 = vld [vmem:[%s1 + $0x8] sm:$0xf]
        %v242 = vld [vmem:[%s1 + $0xc] sm:$0xf]
        %v243 = vld [vmem:[%s1 + $0x10] sm:$0xf]
        %v244 = vld [vmem:[%s1 + $0x14] sm:$0xf]
        %v245 = vld [vmem:[%s1 + $0x18] sm:$0xf]
        %v246 = vld [vmem:[%s1 + $0x1c] sm:$0xf]
        %v247 = vld [vmem:[%s1 + $0x20] sm:$0xf]
        %v248 = vld [vmem:[%s1 + $0x24] sm:$0xf]
        %v249 = vld [vmem:[%s1 + $0x28] sm:$0xf]
        %v250 = vld [vmem:[%s1 + $0x2c] sm:$0xf]
        %v251 = vld [vmem:[%s1 + $0x30] sm:$0xf]
        %v252 = vld [vmem:[%s1 + $0x34] sm:$0xf]
        %v253 = vld [vmem:[%s1 + $0x38] sm:$0xf]
        %v254 = vld [vmem:[%s1 + $0x3c] sm:$0xf]
        %v255 = vld [vmem:[%s1 + $0x40] sm:$0xf]
        %v256 = vld [vmem:[%s1 + $0x44] sm:$0xf]
        %v257 = vld [vmem:[%s1 + $0x48] sm:$0xf]
        %v258 = vld [vmem:[%s1 + $0x4c] sm:$0xf]
        %v259 = vld [vmem:[%s1 + $0x50] sm:$0xf]
        %v260 = vld [vmem:[%s1 + $0x54] sm:$0xf]
        %v261 = vld [vmem:[%s1 + $0x58] sm:$0xf]
        %v262 = vld [vmem:[%s1 + $0x5c] sm:$0xf]
        %v263 = vld [vmem:[%s1 + $0x60] sm:$0xf]
        %v264 = vld [vmem:[%s1 + $0x64] sm:$0xf]
        %v265 = vld [vmem:[%s1 + $0x68] sm:$0xf]
        %v266 = vld [vmem:[%s1 + $0x6c] sm:$0xf]
        %v267 = vld [vmem:[%s1 + $0x70] sm:$0xf]
        %v268 = vld [vmem:[%s1 + $0x74] sm:$0xf]
        %v269 = vld [vmem:[%s1 + $0x78] sm:$0xf]
        %v270 = vld [vmem:[%s1 + $0x7c] sm:$0xf]
        %v271 = vld [vmem:[%s1 + $0x80] sm:$0xf]
        %v272 = vld [vmem:[%s1 + $0x84] sm:$0xf]
        %v273 = vld [vmem:[%s1 + $0x88] sm:$0xf]
        %v274 = vld [vmem:[%s1 + $0x8c] sm:$0xf]
        %v275 = vld [vmem:[%s1 + $0x90] sm:$0xf]
        %v276 = vld [vmem:[%s1 + $0x94] sm:$0xf]
        %v277 = vld [vmem:[%s1 + $0x98] sm:$0xf]
        %v278 = vld [vmem:[%s1 + $0x9c] sm:$0xf]
        %v279 = vld [vmem:[%s1 + $0xa0] sm:$0xf]
        %v280 = vld [vmem:[%s1 + $0xa4] sm:$0xf]
        %v281 = vld [vmem:[%s1 + $0xa8] sm:$0xf]
        %v282 = vld [vmem:[%s1 + $0xac] sm:$0xf]
        %v283 = vld [vmem:[%s1 + $0xb0] sm:$0xf]
        %v284 = vld [vmem:[%s1 + $0xb4] sm:$0xf]
        %v285 = vld [vmem:[%s1 + $0xb8] sm:$0xf]
        %v286 = vld [vmem:[%s1 + $0xbc] sm:$0xf]
        %v287 = vld [vmem:[%s1 + $0xc0] sm:$0xf]
        %v288 = vld [vmem:[%s1 + $0xc4] sm:$0xf]
        %v289 = vld [vmem:[%s1 + $0xc8] sm:$0xf]
        %v290 = vld [vmem:[%s1 + $0xcc] sm:$0xf]
        %v291 = vld [vmem:[%s1 + $0xd0] sm:$0xf]
        %v292 = vld [vmem:[%s1 + $0xd4] sm:$0xf]
        %v293 = vld [vmem:[%s1 + $0xd8] sm:$0xf]
        %v294 = vld [vmem:[%s1 + $0xdc] sm:$0xf]
        %v295 = vld [vmem:[%s1 + $0xe0] sm:$0xf]
        %v296 = vld [vmem:[%s1 + $0xe4] sm:$0xf]
        %v297 = vld [vmem:[%s1 + $0xe8] sm:$0xf]
        %v298 = vld [vmem:[%s1 + $0xec] sm:$0xf]
        %v299 = vld [vmem:[%s1 + $0xf0] sm:$0xf]
        %v300 = vld [vmem:[%s1 + $0xf4] sm:$0xf]
        %v301 = vld [vmem:[%s1 + $0xf8] sm:$0xf]
        %v302 = vld [vmem:[%s1 + $0xfc] sm:$0xf]
        %v303 = vld [vmem:[%s172] sm:$0xff]
        %v304 = vld [vmem:[%s172 + $0x8] sm:$0xff]
        %v305 = vld [vmem:[%s172 + $0x10] sm:$0xff]
        %v306 = vld [vmem:[%s172 + $0x18] sm:$0xff]
        %v307 = vld [vmem:[%s172 + $0x20] sm:$0xff]
        %v308 = vld [vmem:[%s172 + $0x28] sm:$0xff]
        %v309 = vld [vmem:[%s172 + $0x30] sm:$0xff]
        %v310 = vld [vmem:[%s172 + $0x38] sm:$0xff]
        %v311 = vpack.c.bf16 %v304, %v303
        %v312 = vpack.c.bf16 %v306, %v305
        %v313 = vpack.c.bf16 %v308, %v307
        %v314 = vpack.c.bf16 %v310, %v309
        %v315 = vunpack.c.l.bf16 %v311
        %v316 = vunpack.c.h.bf16 %v311
        %v317 = vunpack.c.l.bf16 %v312
        %v318 = vunpack.c.h.bf16 %v312
        %v319 = vunpack.c.l.bf16 %v313
        %v320 = vunpack.c.h.bf16 %v313
        %v321 = vunpack.c.l.bf16 %v314
        %v322 = vunpack.c.h.bf16 %v314
        %v323 = vsub.f32 %v303, %v315
        %v324 = vsub.f32 %v304, %v316
        %v325 = vsub.f32 %v305, %v317
        %v326 = vsub.f32 %v306, %v318
        %v327 = vsub.f32 %v307, %v319
        %v328 = vsub.f32 %v308, %v320
        %v329 = vsub.f32 %v309, %v321
        %v330 = vsub.f32 %v310, %v322
        %v331 = vpack.c.bf16 %v327, %v323
        %v332 = vpack.c.bf16 %v328, %v324
        %v333 = vpack.c.bf16 %v329, %v325
        %v334 = vpack.c.bf16 %v330, %v326
        %v339 = vunpack.c.l.b16 %v311
        %v340 = vunpack.c.h.b16 %v311
        %v341 = vunpack.c.l.b16 %v312
        %v342 = vunpack.c.h.b16 %v312
        %v343 = vunpack.c.l.b16 %v313
        %v344 = vunpack.c.h.b16 %v313
        %v345 = vunpack.c.l.b16 %v314
        %v346 = vunpack.c.h.b16 %v314
        %v347 = vpack.c.b16 %v343, %v339
        %v348 = vpack.c.b16 %v344, %v340
        %v349 = vpack.c.b16 %v345, %v341
        %v350 = vpack.c.b16 %v346, %v342
        %v419 = vunpack.c.l.b16 %v239
        %v420 = vunpack.c.l.b16 %v240
        %v421 = vunpack.c.l.b16 %v241
        %v422 = vunpack.c.l.b16 %v242
        %v423 = vunpack.c.l.b16 %v243
        %v424 = vunpack.c.l.b16 %v244
        %v425 = vunpack.c.l.b16 %v245
        %v426 = vunpack.c.l.b16 %v246
        %v427 = vunpack.c.l.b16 %v247
        %v428 = vunpack.c.l.b16 %v248
        %v429 = vunpack.c.l.b16 %v249
        %v430 = vunpack.c.l.b16 %v250
        %v431 = vunpack.c.l.b16 %v251
        %v432 = vunpack.c.l.b16 %v252
        %v433 = vunpack.c.l.b16 %v253
        %v434 = vunpack.c.l.b16 %v254
        %v435 = vunpack.c.l.b16 %v255
        %v436 = vunpack.c.l.b16 %v256
        %v437 = vunpack.c.l.b16 %v257
        %v438 = vunpack.c.l.b16 %v258
        %v439 = vunpack.c.l.b16 %v259
        %v440 = vunpack.c.l.b16 %v260
        %v441 = vunpack.c.l.b16 %v261
        %v442 = vunpack.c.l.b16 %v262
        %v443 = vunpack.c.l.b16 %v263
        %v444 = vunpack.c.l.b16 %v264
        %v445 = vunpack.c.l.b16 %v265
        %v446 = vunpack.c.l.b16 %v266
        %v447 = vunpack.c.l.b16 %v267
        %v448 = vunpack.c.l.b16 %v268
        %v449 = vunpack.c.l.b16 %v269
        %v450 = vunpack.c.l.b16 %v270
        %v451 = vunpack.c.l.b16 %v271
        %v452 = vunpack.c.l.b16 %v272
        %v453 = vunpack.c.l.b16 %v273
        %v454 = vunpack.c.l.b16 %v274
        %v455 = vunpack.c.l.b16 %v275
        %v456 = vunpack.c.l.b16 %v276
        %v457 = vunpack.c.l.b16 %v277
        %v458 = vunpack.c.l.b16 %v278
        %v459 = vunpack.c.l.b16 %v279
        %v460 = vunpack.c.l.b16 %v280
        %v461 = vunpack.c.l.b16 %v281
        %v462 = vunpack.c.l.b16 %v282
        %v463 = vunpack.c.l.b16 %v283
        %v464 = vunpack.c.l.b16 %v284
        %v465 = vunpack.c.l.b16 %v285
        %v466 = vunpack.c.l.b16 %v286
        %v467 = vunpack.c.l.b16 %v287
        %v468 = vunpack.c.l.b16 %v288
        %v469 = vunpack.c.l.b16 %v289
        %v470 = vunpack.c.l.b16 %v290
        %v471 = vunpack.c.l.b16 %v291
        %v472 = vunpack.c.l.b16 %v292
        %v473 = vunpack.c.l.b16 %v293
        %v474 = vunpack.c.l.b16 %v294
        %v475 = vunpack.c.l.b16 %v295
        %v476 = vunpack.c.l.b16 %v296
        %v477 = vunpack.c.l.b16 %v297
        %v478 = vunpack.c.l.b16 %v298
        %v479 = vunpack.c.l.b16 %v299
        %v480 = vunpack.c.l.b16 %v300
        %v481 = vunpack.c.l.b16 %v301
        %v482 = vunpack.c.l.b16 %v302
        %v483 = vpack.c.b16 %v420, %v419
        %v484 = vpack.c.b16 %v422, %v421
        %v485 = vpack.c.b16 %v424, %v423
        %v486 = vpack.c.b16 %v426, %v425
        %v487 = vpack.c.b16 %v428, %v427
        %v488 = vpack.c.b16 %v430, %v429
        %v489 = vpack.c.b16 %v432, %v431
        %v490 = vpack.c.b16 %v434, %v433
        %v491 = vpack.c.b16 %v436, %v435
        %v492 = vpack.c.b16 %v438, %v437
        %v493 = vpack.c.b16 %v440, %v439
        %v494 = vpack.c.b16 %v442, %v441
        %v495 = vpack.c.b16 %v444, %v443
        %v496 = vpack.c.b16 %v446, %v445
        %v497 = vpack.c.b16 %v448, %v447
        %v498 = vpack.c.b16 %v450, %v449
        %v499 = vpack.c.b16 %v452, %v451
        %v500 = vpack.c.b16 %v454, %v453
        %v501 = vpack.c.b16 %v456, %v455
        %v502 = vpack.c.b16 %v458, %v457
        %v503 = vpack.c.b16 %v460, %v459
        %v504 = vpack.c.b16 %v462, %v461
        %v505 = vpack.c.b16 %v464, %v463
        %v506 = vpack.c.b16 %v466, %v465
        %v507 = vpack.c.b16 %v468, %v467
        %v508 = vpack.c.b16 %v470, %v469
        %v509 = vpack.c.b16 %v472, %v471
        %v510 = vpack.c.b16 %v474, %v473
        %v511 = vpack.c.b16 %v476, %v475
        %v512 = vpack.c.b16 %v478, %v477
        %v513 = vpack.c.b16 %v480, %v479
        %v514 = vpack.c.b16 %v482, %v481
        %547 = vmatpush.bf16.msra.mxu0 %v490
        %548 = vmatpush.bf16.msra.mxu0 %v489
        %549 = vmatpush.bf16.msra.mxu0 %v488
        %550 = vmatpush.bf16.msra.mxu0 %v487
        %551 = vmatpush.bf16.msra.mxu0 %v486
        %552 = vmatpush.bf16.msra.mxu0 %v485
        %553 = vmatpush.bf16.msra.mxu0 %v484
        %554 = vmatpush.bf16.msra.mxu0 %v483
        %555 = vmatmul.bf16.gmra.mxu0 %v347
        %v556 = vpop.f32.mrf.mxu0
        %v557 = vadd.f32 0.0, %v556
        %v558 = vpop.f32.mrf.mxu0
        %v559 = vadd.f32 0.0, %v558
        %560 = vdwg.mxu0
        %561 = vmatpush.bf16.msra.mxu0 %v498
        %562 = vmatpush.bf16.msra.mxu0 %v497
        %563 = vmatpush.bf16.msra.mxu0 %v496
        %564 = vmatpush.bf16.msra.mxu0 %v495
        %565 = vmatpush.bf16.msra.mxu0 %v494
        %566 = vmatpush.bf16.msra.mxu0 %v493
        %567 = vmatpush.bf16.msra.mxu0 %v492
        %568 = vmatpush.bf16.msra.mxu0 %v491
        %569 = vmatmul.bf16.gmra.mxu0 %v348
        %v570 = vpop.f32.mrf.mxu0
        %v571 = vadd.f32 %v557, %v570
        %v572 = vpop.f32.mrf.mxu0
        %v573 = vadd.f32 %v559, %v572
        %574 = vdwg.mxu0
        %575 = vmatpush.bf16.msra.mxu0 %v506
        %576 = vmatpush.bf16.msra.mxu0 %v505
        %577 = vmatpush.bf16.msra.mxu0 %v504
        %578 = vmatpush.bf16.msra.mxu0 %v503
        %579 = vmatpush.bf16.msra.mxu0 %v502
        %580 = vmatpush.bf16.msra.mxu0 %v501
        %581 = vmatpush.bf16.msra.mxu0 %v500
        %582 = vmatpush.bf16.msra.mxu0 %v499
        %583 = vmatmul.bf16.gmra.mxu0 %v349
        %v584 = vpop.f32.mrf.mxu0
        %v585 = vadd.f32 %v571, %v584
        %v586 = vpop.f32.mrf.mxu0
        %v587 = vadd.f32 %v573, %v586
        %588 = vdwg.mxu0
        %589 = vmatpush.bf16.msra.mxu0 %v514
        %590 = vmatpush.bf16.msra.mxu0 %v513
        %591 = vmatpush.bf16.msra.mxu0 %v512
        %592 = vmatpush.bf16.msra.mxu0 %v511
        %593 = vmatpush.bf16.msra.mxu0 %v510
        %594 = vmatpush.bf16.msra.mxu0 %v509
        %595 = vmatpush.bf16.msra.mxu0 %v508
        %596 = vmatpush.bf16.msra.mxu0 %v507
        %597 = vmatmul.bf16.gmra.mxu0 %v350
        %v598 = vpop.f32.mrf.mxu0
        %v599 = vadd.f32 %v585, %v598
        %v600 = vpop.f32.mrf.mxu0
        %v601 = vadd.f32 %v587, %v600
        %602 = vdwg.mxu0
        %v667 = vunpack.c.l.b16 %v175
        %v668 = vunpack.c.l.b16 %v176
        %v669 = vunpack.c.l.b16 %v177
        %v670 = vunpack.c.l.b16 %v178
        %v671 = vunpack.c.l.b16 %v179
        %v672 = vunpack.c.l.b16 %v180
        %v673 = vunpack.c.l.b16 %v181
        %v674 = vunpack.c.l.b16 %v182
        %v675 = vunpack.c.l.b16 %v183
        %v676 = vunpack.c.l.b16 %v184
        %v677 = vunpack.c.l.b16 %v185
        %v678 = vunpack.c.l.b16 %v186
        %v679 = vunpack.c.l.b16 %v187
        %v680 = vunpack.c.l.b16 %v188
        %v681 = vunpack.c.l.b16 %v189
        %v682 = vunpack.c.l.b16 %v190
        %v683 = vunpack.c.l.b16 %v191
        %v684 = vunpack.c.l.b16 %v192
        %v685 = vunpack.c.l.b16 %v193
        %v686 = vunpack.c.l.b16 %v194
        %v687 = vunpack.c.l.b16 %v195
        %v688 = vunpack.c.l.b16 %v196
        %v689 = vunpack.c.l.b16 %v197
        %v690 = vunpack.c.l.b16 %v198
        %v691 = vunpack.c.l.b16 %v199
        %v692 = vunpack.c.l.b16 %v200
        %v693 = vunpack.c.l.b16 %v201
        %v694 = vunpack.c.l.b16 %v202
        %v695 = vunpack.c.l.b16 %v203
        %v696 = vunpack.c.l.b16 %v204
        %v697 = vunpack.c.l.b16 %v205
        %v698 = vunpack.c.l.b16 %v206
        %v699 = vunpack.c.l.b16 %v207
        %v700 = vunpack.c.l.b16 %v208
        %v701 = vunpack.c.l.b16 %v209
        %v702 = vunpack.c.l.b16 %v210
        %v703 = vunpack.c.l.b16 %v211
        %v704 = vunpack.c.l.b16 %v212
        %v705 = vunpack.c.l.b16 %v213
        %v706 = vunpack.c.l.b16 %v214
        %v707 = vunpack.c.l.b16 %v215
        %v708 = vunpack.c.l.b16 %v216
        %v709 = vunpack.c.l.b16 %v217
        %v710 = vunpack.c.l.b16 %v218
        %v711 = vunpack.c.l.b16 %v219
        %v712 = vunpack.c.l.b16 %v220
        %v713 = vunpack.c.l.b16 %v221
        %v714 = vunpack.c.l.b16 %v222
        %v715 = vunpack.c.l.b16 %v223
        %v716 = vunpack.c.l.b16 %v224
        %v717 = vunpack.c.l.b16 %v225
        %v718 = vunpack.c.l.b16 %v226
        %v719 = vunpack.c.l.b16 %v227
        %v720 = vunpack.c.l.b16 %v228
        %v721 = vunpack.c.l.b16 %v229
        %v722 = vunpack.c.l.b16 %v230
        %v723 = vunpack.c.l.b16 %v231
        %v724 = vunpack.c.l.b16 %v232
        %v725 = vunpack.c.l.b16 %v233
        %v726 = vunpack.c.l.b16 %v234
        %v727 = vunpack.c.l.b16 %v235
        %v728 = vunpack.c.l.b16 %v236
        %v729 = vunpack.c.l.b16 %v237
        %v730 = vunpack.c.l.b16 %v238
        %v731 = vpack.c.b16 %v668, %v667
        %v732 = vpack.c.b16 %v670, %v669
        %v733 = vpack.c.b16 %v672, %v671
        %v734 = vpack.c.b16 %v674, %v673
        %v735 = vpack.c.b16 %v676, %v675
        %v736 = vpack.c.b16 %v678, %v677
        %v737 = vpack.c.b16 %v680, %v679
        %v738 = vpack.c.b16 %v682, %v681
        %v739 = vpack.c.b16 %v684, %v683
        %v740 = vpack.c.b16 %v686, %v685
        %v741 = vpack.c.b16 %v688, %v687
        %v742 = vpack.c.b16 %v690, %v689
        %v743 = vpack.c.b16 %v692, %v691
        %v744 = vpack.c.b16 %v694, %v693
        %v745 = vpack.c.b16 %v696, %v695
        %v746 = vpack.c.b16 %v698, %v697
        %v747 = vpack.c.b16 %v700, %v699
        %v748 = vpack.c.b16 %v702, %v701
        %v749 = vpack.c.b16 %v704, %v703
        %v750 = vpack.c.b16 %v706, %v705
        %v751 = vpack.c.b16 %v708, %v707
        %v752 = vpack.c.b16 %v710, %v709
        %v753 = vpack.c.b16 %v712, %v711
        %v754 = vpack.c.b16 %v714, %v713
        %v755 = vpack.c.b16 %v716, %v715
        %v756 = vpack.c.b16 %v718, %v717
        %v757 = vpack.c.b16 %v720, %v719
        %v758 = vpack.c.b16 %v722, %v721
        %v759 = vpack.c.b16 %v724, %v723
        %v760 = vpack.c.b16 %v726, %v725
        %v761 = vpack.c.b16 %v728, %v727
        %v762 = vpack.c.b16 %v730, %v729
        %795 = vmatpush.bf16.msra.mxu0 %v738
        %796 = vmatpush.bf16.msra.mxu0 %v737
        %797 = vmatpush.bf16.msra.mxu0 %v736
        %798 = vmatpush.bf16.msra.mxu0 %v735
        %799 = vmatpush.bf16.msra.mxu0 %v734
        %800 = vmatpush.bf16.msra.mxu0 %v733
        %801 = vmatpush.bf16.msra.mxu0 %v732
        %802 = vmatpush.bf16.msra.mxu0 %v731
        %803 = vmatmul.bf16.gmra.mxu0 %v347
        %v804 = vpop.f32.mrf.mxu0
        %v805 = vadd.f32 %v599, %v804
        %v806 = vpop.f32.mrf.mxu0
        %v807 = vadd.f32 %v601, %v806
        %808 = vdwg.mxu0
        %809 = vmatpush.bf16.msra.mxu0 %v746
        %810 = vmatpush.bf16.msra.mxu0 %v745
        %811 = vmatpush.bf16.msra.mxu0 %v744
        %812 = vmatpush.bf16.msra.mxu0 %v743
        %813 = vmatpush.bf16.msra.mxu0 %v742
        %814 = vmatpush.bf16.msra.mxu0 %v741
        %815 = vmatpush.bf16.msra.mxu0 %v740
        %816 = vmatpush.bf16.msra.mxu0 %v739
        %817 = vmatmul.bf16.gmra.mxu0 %v348
        %v818 = vpop.f32.mrf.mxu0
        %v819 = vadd.f32 %v805, %v818
        %v820 = vpop.f32.mrf.mxu0
        %v821 = vadd.f32 %v807, %v820
        %822 = vdwg.mxu0
        %823 = vmatpush.bf16.msra.mxu0 %v754
        %824 = vmatpush.bf16.msra.mxu0 %v753
        %825 = vmatpush.bf16.msra.mxu0 %v752
        %826 = vmatpush.bf16.msra.mxu0 %v751
        %827 = vmatpush.bf16.msra.mxu0 %v750
        %828 = vmatpush.bf16.msra.mxu0 %v749
        %829 = vmatpush.bf16.msra.mxu0 %v748
        %830 = vmatpush.bf16.msra.mxu0 %v747
        %831 = vmatmul.bf16.gmra.mxu0 %v349
        %v832 = vpop.f32.mrf.mxu0
        %v833 = vadd.f32 %v819, %v832
        %v834 = vpop.f32.mrf.mxu0
        %v835 = vadd.f32 %v821, %v834
        %836 = vdwg.mxu0
        %837 = vmatpush.bf16.msra.mxu0 %v762
        %838 = vmatpush.bf16.msra.mxu0 %v761
        %839 = vmatpush.bf16.msra.mxu0 %v760
        %840 = vmatpush.bf16.msra.mxu0 %v759
        %841 = vmatpush.bf16.msra.mxu0 %v758
        %842 = vmatpush.bf16.msra.mxu0 %v757
        %843 = vmatpush.bf16.msra.mxu0 %v756
        %844 = vmatpush.bf16.msra.mxu0 %v755
        %845 = vmatmul.bf16.gmra.mxu0 %v350
        %v846 = vpop.f32.mrf.mxu0
        %v847 = vadd.f32 %v833, %v846
        %v848 = vpop.f32.mrf.mxu0
        %v849 = vadd.f32 %v835, %v848
        %850 = vdwg.mxu0
        %851 = vmatpush.bf16.msra.mxu0 %v738
        %852 = vmatpush.bf16.msra.mxu0 %v737
        %853 = vmatpush.bf16.msra.mxu0 %v736
        %854 = vmatpush.bf16.msra.mxu0 %v735
        %855 = vmatpush.bf16.msra.mxu0 %v734
        %856 = vmatpush.bf16.msra.mxu0 %v733
        %857 = vmatpush.bf16.msra.mxu0 %v732
        %858 = vmatpush.bf16.msra.mxu0 %v731
        %859 = vmatmul.bf16.gmra.mxu0 %v331
        %v860 = vpop.f32.mrf.mxu0
        %v861 = vadd.f32 0.0, %v860
        %v862 = vpop.f32.mrf.mxu0
        %v863 = vadd.f32 0.0, %v862
        %864 = vdwg.mxu0
        %865 = vmatpush.bf16.msra.mxu0 %v746
        %866 = vmatpush.bf16.msra.mxu0 %v745
        %867 = vmatpush.bf16.msra.mxu0 %v744
        %868 = vmatpush.bf16.msra.mxu0 %v743
        %869 = vmatpush.bf16.msra.mxu0 %v742
        %870 = vmatpush.bf16.msra.mxu0 %v741
        %871 = vmatpush.bf16.msra.mxu0 %v740
        %872 = vmatpush.bf16.msra.mxu0 %v739
        %873 = vmatmul.bf16.gmra.mxu0 %v332
        %v874 = vpop.f32.mrf.mxu0
        %v875 = vadd.f32 %v861, %v874
        %v876 = vpop.f32.mrf.mxu0
        %v877 = vadd.f32 %v863, %v876
        %878 = vdwg.mxu0
        %879 = vmatpush.bf16.msra.mxu0 %v754
        %880 = vmatpush.bf16.msra.mxu0 %v753
        %881 = vmatpush.bf16.msra.mxu0 %v752
        %882 = vmatpush.bf16.msra.mxu0 %v751
        %883 = vmatpush.bf16.msra.mxu0 %v750
        %884 = vmatpush.bf16.msra.mxu0 %v749
        %885 = vmatpush.bf16.msra.mxu0 %v748
        %886 = vmatpush.bf16.msra.mxu0 %v747
        %887 = vmatmul.bf16.gmra.mxu0 %v333
        %v888 = vpop.f32.mrf.mxu0
        %v889 = vadd.f32 %v875, %v888
        %v890 = vpop.f32.mrf.mxu0
        %v891 = vadd.f32 %v877, %v890
        %892 = vdwg.mxu0
        %893 = vmatpush.bf16.msra.mxu0 %v762
        %894 = vmatpush.bf16.msra.mxu0 %v761
        %895 = vmatpush.bf16.msra.mxu0 %v760
        %896 = vmatpush.bf16.msra.mxu0 %v759
        %897 = vmatpush.bf16.msra.mxu0 %v758
        %898 = vmatpush.bf16.msra.mxu0 %v757
        %899 = vmatpush.bf16.msra.mxu0 %v756
        %900 = vmatpush.bf16.msra.mxu0 %v755
        %901 = vmatmul.bf16.gmra.mxu0 %v334
        %v902 = vpop.f32.mrf.mxu0
        %v903 = vadd.f32 %v889, %v902
        %v904 = vpop.f32.mrf.mxu0
        %v905 = vadd.f32 %v891, %v904
        %906 = vdwg.mxu0
        %v907 = vadd.f32 %v847, %v903
        %v908 = vadd.f32 %v849, %v905
        %909 = vst [vmem:[%s166] sm:$0xff] %v907
        %910 = vst [vmem:[%s166 + $0x8] sm:$0xff] %v908
        %s911 = sand.u32 %s93, 1
        %s912 = scalar_lea.sflag [#allocation3], %s911
        %s913 = sand.u32 %s93, 1
        %s914 = smul.addr %s913, 16
        %s915 = scalar_lea.vmem [#allocation2], %s914
        // Predicated region
        $region33: #{list_dense_forward.1} parent=31 // pred_check
          %p916 = pneg %p103
        $region34: #{list_dense_forward.1} parent=31 // pred_check_branch
          %918 = sbr.rel (%p916) target = $region36
        $region35: #{list_dense_forward.1} parent=31 // pred_region
          %s919 = smul.u32 2, %s17
          %921 = vsyncadd %s912, 0
          %s922 = smul.addr %s919, 8
          %s923 = scalar_lea.hbm %s3, %s922
          %s924 = sshll.u32 %s915, 4
          %s925 = int_to_ptr.vmem [resolvable:$true] %s924
          %s926 = sshll.u32 %s923, 4
          %s927 = int_to_ptr.hbm [resolvable:$true] %s926
          %932 = dma.vmem_to_hbm [thread:$0]  %s925, 256, %s927, %s912, 128, 128, 8
        $region36: #{list_dense_forward.1} parent=31 // pred_fallthru
          _
      $region32: #{list_dense_forward.1} parent=5 // pred_fallthru
        _
      %p933 = scmp.le.s32.totalorder 2, %s12
      // Predicated region
      $region37: #{list_dense_forward.1} parent=5 // pred_check
        %p934 = pneg %p933
      $region38: #{list_dense_forward.1} parent=5 // pred_check_branch
        %936 = sbr.rel (%p934) target = $region40
      $region39: #{list_dense_forward.1} parent=5 // pred_region
        %s937 = ssub.s32 %s12, 2
        // Predicated region
        $region41: #{list_dense_forward.1} parent=39 // pred_check
          %p938 = pneg %p109
        $region42: #{list_dense_forward.1} parent=39 // pred_check_branch
          %940 = sbr.rel (%p938) target = $region44
        $region43: #{list_dense_forward.1} parent=39 // pred_region
          %s941 = sand.u32 %s94, 1
          %s942 = scalar_lea.sflag [#allocation3], %s941
          %s943 = sand.u32 %s94, 1
          %s944 = smul.addr %s943, 16
          %s945 = scalar_lea.vmem [#allocation2], %s944
          %947 = dma.done %s942, 256
        $region44: #{list_dense_forward.1} parent=39 // pred_fallthru
          _
      $region40: #{list_dense_forward.1} parent=5 // pred_fallthru
        _
    $region6: #{list_dense_forward.1} parent=1 // loop_footer
      %s16 = sadd.s32 1, %s12
    $region7: #{list_dense_forward.1} parent=1 // loop_footer_branch
      %11 = sbr.rel target = $region3
    $region8: #{list_dense_forward.1} parent=1 // loop_exit
      _
    %948 = vsyncpa [#allocation3], 1
    %s949 = scalar_lea.sflag [#allocation3], 1
    %950 = vsyncpa %s949, 1

</llo_original>
